<compile_context>
chip_gen: v6e
topology: v6e:2x2x1
jax: 0.10.0
libtpu: 0.0.40
codegen_flags: <defaults>
</compile_context>

<pallas_src>
import jax
import jax.numpy as jnp
from jax import lax
from jax.experimental import pallas as pl
from jax.experimental.pallas import tpu as pltpu


def critic_kernel(x_ref, w1_ref, b1_ref, w2_ref, b2_ref, w3_ref, b3_ref, out_ref):
    # x_ref: (TB, n_states); w1_ref: (H, n_states).
    # Layer 1 (MXU): contract the feature axis of both operands -> (H, TB),
    # i.e. batch lands on lanes with no wrapper-side transpose.  K is tiny
    # (n_states ~ 4) so this MXU pass is essentially free.
    h1 = lax.dot_general(
        w1_ref[...], x_ref[...],
        dimension_numbers=(((1,), (1,)), ((), ())),
        preferred_element_type=jnp.float32,
    )
    h1 = jnp.maximum(h1 + b1_ref[...], 0.0)

    # Layer 2 (MXU, dominant FLOPs): bf16 operands, f32 accumulation.
    h2 = jnp.dot(w2_ref[...], h1.astype(jnp.bfloat16),
                 preferred_element_type=jnp.float32)
    h2 = jnp.maximum(h2 + b2_ref[...], 0.0)

    # Layer 3 (N=1): VPU multiply + XLU sublane reduce instead of an MXU pass
    # with a single output column.  Result (1, TB) is lane-dense.  b3 is a
    # scalar read from SMEM.
    v = jnp.sum(h2 * w3_ref[...], axis=0, keepdims=True) + b3_ref[0]
    out_ref[...] = v.astype(out_ref.dtype)


def critic_forward(x, params, *, block_b=2048):
    """x: (B, n_states) float32.  params: dict of w1,b1,w2,b2,w3,b3 in (in,out) layout.

    Returns (B, 1) value estimates matching the PyTorch module (to bf16-MXU accuracy).
    """
    B, n_states = x.shape
    H = params["w1"].shape[1]

    if B <= block_b:
        # Single grid step: block shapes equal the full arrays, no padding and
        # no wrapper-side ops on x at all.
        TB, n_blocks, B_pad = B, 1, B
        x_in = x
    else:
        # At least 2 blocks so v7x's two TensorCores split the "parallel" axis;
        # lane-dense tiles (multiple of 128), capped at block_b for v5e's
        # 16 MiB scoped-VMEM default.
        n_blocks = max(2, pl.cdiv(B, block_b))
        TB = pl.cdiv(B, n_blocks * 128) * 128          # round_up(ceil(B/n_blocks), 128)
        B_pad = n_blocks * TB
        x_in = jnp.pad(x, ((0, B_pad - B), (0, 0))) if B_pad > B else x

    # Transposed weight layout so the kernel computes W^T @ x^T (batch on lanes).
    w1t = params["w1"].T                               # (H, n_states) f32
    b1c = params["b1"].reshape(H, 1)                   # (H, 1) f32
    w2t = params["w2"].T.astype(jnp.bfloat16)          # (H, H) bf16 for the MXU
    b2c = params["b2"].reshape(H, 1)                   # (H, 1) f32
    w3c = params["w3"].reshape(H, 1)                   # (H, 1) f32
    b3v = params["b3"].reshape(1)                      # (1,) scalar -> SMEM

    const = lambda shape: pl.BlockSpec(shape, lambda i: (0, 0))   # resident weights

    out = pl.pallas_call(
        critic_kernel,
        out_shape=jax.ShapeDtypeStruct((1, B_pad), jnp.float32),
        grid=(n_blocks,),
        in_specs=[
            pl.BlockSpec((TB, n_states), lambda i: (i, 0)),        # x tile
            const((H, n_states)),                                  # w1^T
            const((H, 1)),                                         # b1
            const((H, H)),                                         # w2^T (bf16)
            const((H, 1)),                                         # b2
            const((H, 1)),                                         # w3
            pl.BlockSpec((1,), lambda i: (0,),                     # b3 scalar in SMEM
                         memory_space=pltpu.SMEM),
        ],
        out_specs=pl.BlockSpec((1, TB), lambda i: (0, i)),         # lane-dense values
        compiler_params=pltpu.CompilerParams(
            dimension_semantics=("parallel",),                     # megacore / v7x 2-TC split
        ),
    )(x_in, w1t, b1c, w2t, b2c, w3c, b3v)

    return out[0, :B].reshape(B, 1)


def init_critic_params(key, n_states, hidden=128):
    """PyTorch-default-style Linear init (uniform(-1/sqrt(fan_in), 1/sqrt(fan_in)));
    stored in (in, out) layout."""
    k = jax.random.split(key, 6)

    def lin(kw, kb, fan_in, fan_out):
        bound = 1.0 / jnp.sqrt(fan_in)
        w = jax.random.uniform(kw, (fan_in, fan_out), jnp.float32, -bound, bound)
        b = jax.random.uniform(kb, (1, fan_out), jnp.float32, -bound, bound)
        return w, b

    w1, b1 = lin(k[0], k[1], n_states, hidden)
    w2, b2 = lin(k[2], k[3], hidden, hidden)
    w3, b3 = lin(k[4], k[5], hidden, 1)
    return {"w1": w1, "b1": b1, "w2": w2, "b2": b2, "w3": w3, "b3": b3}


def critic_reference(x, params):
    h1 = jnp.maximum(x @ params["w1"] + params["b1"], 0.0)
    h2 = jnp.maximum(h1 @ params["w2"] + params["b2"], 0.0)
    return h2 @ params["w3"] + params["b3"]


if __name__ == "__main__":
    key = jax.random.PRNGKey(0)
    n_states = 4          # CartPole-v0 observation dim
    batch = 8

    kp, kx, kx2 = jax.random.split(key, 3)
    params = init_critic_params(kp, n_states)

    # Tolerance reflects bf16 MXU operands on the dominant 128x128 layer
    # (the f32 reference itself also runs bf16-pass matmuls under default
    # TPU precision).
    ATOL = RTOL = 2e-2

    # Small-batch check: single grid step, zero wrapper ops on x.
    x = jax.random.normal(kx, (batch, n_states), jnp.float32)
    out = jax.block_until_ready(critic_forward(x, params))
    ref = critic_reference(x, params)
    assert out.shape == (batch, 1), out.shape
    assert jnp.allclose(out, ref, atol=ATOL, rtol=RTOL), (out, ref)

    # Multi-block grid check (forces >= 2 parallel blocks + batch padding).
    x2 = jax.random.normal(kx2, (300, n_states), jnp.float32)
    out2 = jax.block_until_ready(critic_forward(x2, params, block_b=128))
    ref2 = critic_reference(x2, params)
    assert out2.shape == (300, 1), out2.shape
    assert jnp.allclose(out2, ref2, atol=ATOL, rtol=RTOL)

    print("KERNEL_OK")
</pallas_src>

<mosaic_0001>
module attributes {stable_mosaic.version = 11 : i64} {
  func.func @critic_kernel(%arg0: i32, %arg1: memref<8x4xf32, #tpu.memory_space<vmem>>, %arg2: memref<128x4xf32, #tpu.memory_space<vmem>>, %arg3: memref<128x1xf32, #tpu.memory_space<vmem>>, %arg4: memref<128x128xbf16, #tpu.memory_space<vmem>>, %arg5: memref<128x1xf32, #tpu.memory_space<vmem>>, %arg6: memref<128x1xf32, #tpu.memory_space<vmem>>, %arg7: memref<1xf32, #tpu.memory_space<smem>>, %arg8: memref<1x8xf32, #tpu.memory_space<vmem>>) attributes {dimension_semantics = [#tpu.dimension_semantics<parallel>], iteration_bounds = array<i64: 1>, scalar_prefetch = 0 : i64, scratch_operands = 0 : i64, tpu.core_type = #tpu.core_type<tc>, window_params = [{transform_indices = @transform_0, window_bounds = array<i64: 8, 4>}, {pipeline_mode = #tpu.pipeline_mode<synchronous>, transform_indices = @transform_1, window_bounds = array<i64: 128, 4>}, {pipeline_mode = #tpu.pipeline_mode<synchronous>, transform_indices = @transform_2, window_bounds = array<i64: 128, 1>}, {pipeline_mode = #tpu.pipeline_mode<synchronous>, transform_indices = @transform_3, window_bounds = array<i64: 128, 128>}, {pipeline_mode = #tpu.pipeline_mode<synchronous>, transform_indices = @transform_4, window_bounds = array<i64: 128, 1>}, {pipeline_mode = #tpu.pipeline_mode<synchronous>, transform_indices = @transform_5, window_bounds = array<i64: 128, 1>}, {transform_indices = @transform_6, window_bounds = array<i64: 1>}, {transform_indices = @transform_7, window_bounds = array<i64: 1, 8>}]} {
    %c0 = arith.constant 0 : index
    %c0_0 = arith.constant 0 : index
    %0 = vector.load %arg2[%c0, %c0_0] : memref<128x4xf32, #tpu.memory_space<vmem>>, vector<128x4xf32>
    %c0_1 = arith.constant 0 : index
    %c0_2 = arith.constant 0 : index
    %1 = vector.load %arg1[%c0_1, %c0_2] : memref<8x4xf32, #tpu.memory_space<vmem>>, vector<8x4xf32>
    %cst = arith.constant dense<0.000000e+00> : vector<128x8xf32>
    %2 = tpu.matmul %0, %1, %cst {dimension_numbers = #tpu.dot_dimension_numbers<[1], [1], [0], [0], [0, 0, 1, 0], [], []>} : vector<128x4xf32>, vector<8x4xf32>, vector<128x8xf32> -> vector<128x8xf32>
    %c0_3 = arith.constant 0 : index
    %c0_4 = arith.constant 0 : index
    %3 = vector.load %arg3[%c0_3, %c0_4] : memref<128x1xf32, #tpu.memory_space<vmem>>, vector<128x1xf32>
    %4 = vector.broadcast %3 : vector<128x1xf32> to vector<128x8xf32>
    %5 = arith.addf %2, %4 : vector<128x8xf32>
    %cst_5 = arith.constant 0.000000e+00 : f32
    %6 = vector.broadcast %cst_5 : f32 to vector<128x8xf32>
    %7 = arith.maximumf %5, %6 : vector<128x8xf32>
    %c0_6 = arith.constant 0 : index
    %c0_7 = arith.constant 0 : index
    %8 = vector.load %arg4[%c0_6, %c0_7] : memref<128x128xbf16, #tpu.memory_space<vmem>>, vector<128x128xbf16>
    %9 = arith.truncf %7 : vector<128x8xf32> to vector<128x8xbf16>
    %cst_8 = arith.constant dense<0.000000e+00> : vector<128x8xf32>
    %10 = tpu.matmul %8, %9, %cst_8 {dimension_numbers = #tpu.dot_dimension_numbers<[1], [0], [0], [1], [0, 0, 1, 1], [], []>} : vector<128x128xbf16>, vector<128x8xbf16>, vector<128x8xf32> -> vector<128x8xf32>
    %c0_9 = arith.constant 0 : index
    %c0_10 = arith.constant 0 : index
    %11 = vector.load %arg5[%c0_9, %c0_10] : memref<128x1xf32, #tpu.memory_space<vmem>>, vector<128x1xf32>
    %12 = vector.broadcast %11 : vector<128x1xf32> to vector<128x8xf32>
    %13 = arith.addf %10, %12 : vector<128x8xf32>
    %cst_11 = arith.constant 0.000000e+00 : f32
    %14 = vector.broadcast %cst_11 : f32 to vector<128x8xf32>
    %15 = arith.maximumf %13, %14 : vector<128x8xf32>
    %c0_12 = arith.constant 0 : index
    %c0_13 = arith.constant 0 : index
    %16 = vector.load %arg6[%c0_12, %c0_13] : memref<128x1xf32, #tpu.memory_space<vmem>>, vector<128x1xf32>
    %17 = vector.broadcast %16 : vector<128x1xf32> to vector<128x8xf32>
    %18 = arith.mulf %15, %17 : vector<128x8xf32>
    %cst_14 = arith.constant dense<0.000000e+00> : vector<8xf32>
    %19 = vector.multi_reduction <add>, %18, %cst_14 [0] : vector<128x8xf32> to vector<8xf32>
    %20 = vector.shape_cast %19 : vector<8xf32> to vector<1x8xf32>
    %c0_15 = arith.constant 0 : index
    %21 = memref.load %arg7[%c0_15] : memref<1xf32, #tpu.memory_space<smem>>
    %22 = vector.broadcast %21 : f32 to vector<1x8xf32>
    %23 = arith.addf %20, %22 : vector<1x8xf32>
    %c0_16 = arith.constant 0 : index
    %c0_17 = arith.constant 0 : index
    %24 = vector.load %arg8[%c0_16, %c0_17] : memref<1x8xf32, #tpu.memory_space<vmem>>, vector<1x8xf32>
    tpu.vector_store %arg8[%c0_16, %c0_17], %23 {strides = array<i32>} : memref<1x8xf32, #tpu.memory_space<vmem>>, vector<1x8xf32>,
    return
  }
  func.func @transform_0(%arg0: i32) -> (i32, i32) {
    %c0_i32 = arith.constant 0 : i32
    %c0_i32_0 = arith.constant 0 : i32
    return %arg0, %c0_i32 : i32, i32
  }
  func.func @transform_1(%arg0: i32) -> (i32, i32) {
    %c0_i32 = arith.constant 0 : i32
    %c0_i32_0 = arith.constant 0 : i32
    %c0_i32_1 = arith.constant 0 : i32
    return %c0_i32, %c0_i32_0 : i32, i32
  }
  func.func @transform_2(%arg0: i32) -> (i32, i32) {
    %c0_i32 = arith.constant 0 : i32
    %c0_i32_0 = arith.constant 0 : i32
    %c0_i32_1 = arith.constant 0 : i32
    return %c0_i32, %c0_i32_0 : i32, i32
  }
  func.func @transform_3(%arg0: i32) -> (i32, i32) {
    %c0_i32 = arith.constant 0 : i32
    %c0_i32_0 = arith.constant 0 : i32
    %c0_i32_1 = arith.constant 0 : i32
    return %c0_i32, %c0_i32_0 : i32, i32
  }
  func.func @transform_4(%arg0: i32) -> (i32, i32) {
    %c0_i32 = arith.constant 0 : i32
    %c0_i32_0 = arith.constant 0 : i32
    %c0_i32_1 = arith.constant 0 : i32
    return %c0_i32, %c0_i32_0 : i32, i32
  }
  func.func @transform_5(%arg0: i32) -> (i32, i32) {
    %c0_i32 = arith.constant 0 : i32
    %c0_i32_0 = arith.constant 0 : i32
    %c0_i32_1 = arith.constant 0 : i32
    return %c0_i32, %c0_i32_0 : i32, i32
  }
  func.func @transform_6(%arg0: i32) -> i32 {
    %c0_i32 = arith.constant 0 : i32
    %c0_i32_0 = arith.constant 0 : i32
    return %c0_i32 : i32
  }
  func.func @transform_7(%arg0: i32) -> (i32, i32) {
    %c0_i32 = arith.constant 0 : i32
    %c0_i32_0 = arith.constant 0 : i32
    return %c0_i32, %arg0 : i32, i32
  }
}

</mosaic_0001>

<llo_original>
// kernel: tpu_custom_call.1
$region0: #{tpu_custom_call.1}
  #allocation0 [shape = 'u32[]', space=smem, size = 0x4, offset = 0x4, fixed_abs, tag = 'smem constant byte address 0x4 - core index']
  #allocation1 [shape = 'u32[144,128]{1,0:T(1,128)}', space=vmem, size = 0x12000, scoped, tag = 'internal scratch']
  #allocation2 [shape = 'f32[1]{0:T(128)S(6)}', space=smem, size = 0x200, scoped, tag = 'scoped memory for tpu_custom_call.1']
  %s0 = inlined_call_operand.vmem [shape: f32[8,4], index: 0, kind: input, shape index: {}]
  %s1 = inlined_call_operand.vmem [shape: f32[128,4], index: 1, kind: input, shape index: {}]
  %s2 = inlined_call_operand.vmem [shape: f32[128,1], index: 2, kind: input, shape index: {}]
  %s3 = inlined_call_operand.vmem [shape: bf16[128,128], index: 3, kind: input, shape index: {}]
  %s4 = inlined_call_operand.vmem [shape: f32[128,1], index: 4, kind: input, shape index: {}]
  %s5 = inlined_call_operand.vmem [shape: f32[128,1], index: 5, kind: input, shape index: {}]
  %s6 = inlined_call_operand.<no memory space> [shape: f32[1], index: 6, kind: input, shape index: {}]
  %s7 = inlined_call_operand.hbm [shape: f32[1,8], index: 7, kind: output, shape index: {}]
  %s8 = sld [smem:[#allocation0]]
  $region38: #{tpu_custom_call.1} parent=0
    _
  %s10 = ssub.s32 1, %s8
  %s11 = scalar_select 0, %s10, %s8
  %12 = sst [smem:[#allocation2]] %s6
  $region1: #{tpu_custom_call.1} parent=0
    #allocation3 [shape = 'u8[512]{0}', space=vmem, size = 0x400, scoped, tag = 'output window, operand 0, single buffered']
    #allocation4 [shape = 's32[1]{0}', space=sflag, size = 0x4, scoped, tag = 'scoped memory for tpu_custom_call.1']
    %13 = vsyncpa [#allocation4], 0
    // Predicated region
    $region2: #{tpu_custom_call.1} parent=1 // pred_check
      _
    $region3: #{tpu_custom_call.1} parent=1 // pred_check_branch
      %15 = sbr.rel (0) target = $region5
    $region4: #{tpu_custom_call.1} parent=1 // pred_region
      _
    $region5: #{tpu_custom_call.1} parent=1 // pred_fallthru
      _
    // Predicated region
    $region6: #{tpu_custom_call.1} parent=1 // pred_check
      _
    $region7: #{tpu_custom_call.1} parent=1 // pred_check_branch
      %17 = sbr.rel (0) target = $region9
    $region8: #{tpu_custom_call.1} parent=1 // pred_region
      _
    $region9: #{tpu_custom_call.1} parent=1 // pred_fallthru
      _
    // Predicated region
    $region10: #{tpu_custom_call.1} parent=1 // pred_check
      _
    $region11: #{tpu_custom_call.1} parent=1 // pred_check_branch
      %19 = sbr.rel (0) target = $region13
    $region12: #{tpu_custom_call.1} parent=1 // pred_region
      _
    $region13: #{tpu_custom_call.1} parent=1 // pred_fallthru
      _
    // Predicated region
    $region14: #{tpu_custom_call.1} parent=1 // pred_check
      _
    $region15: #{tpu_custom_call.1} parent=1 // pred_check_branch
      %21 = sbr.rel (0) target = $region17
    $region16: #{tpu_custom_call.1} parent=1 // pred_region
      _
    $region17: #{tpu_custom_call.1} parent=1 // pred_fallthru
      _
    // Predicated region
    $region18: #{tpu_custom_call.1} parent=1 // pred_check
      _
    $region19: #{tpu_custom_call.1} parent=1 // pred_check_branch
      %23 = sbr.rel (0) target = $region21
    $region20: #{tpu_custom_call.1} parent=1 // pred_region
      _
    $region21: #{tpu_custom_call.1} parent=1 // pred_fallthru
      _
    // Predicated region
    $region22: #{tpu_custom_call.1} parent=1 // pred_check
      _
    $region23: #{tpu_custom_call.1} parent=1 // pred_check_branch
      %25 = sbr.rel (0) target = $region25
    $region24: #{tpu_custom_call.1} parent=1 // pred_region
      _
    $region25: #{tpu_custom_call.1} parent=1 // pred_fallthru
      _
    // Predicated region
    $region26: #{tpu_custom_call.1} parent=1 // pred_check
      _
    $region27: #{tpu_custom_call.1} parent=1 // pred_check_branch
      %27 = sbr.rel (0) target = $region29
    $region28: #{tpu_custom_call.1} parent=1 // pred_region
      _
    $region29: #{tpu_custom_call.1} parent=1 // pred_fallthru
      _
    %v29 = vld [vmem:[%s1] sm:$0xff]
    %v30 = vld [vmem:[%s1 + $0x8] sm:$0xff]
    %v31 = vld [vmem:[%s1 + $0x10] sm:$0xff]
    %v32 = vld [vmem:[%s1 + $0x18] sm:$0xff]
    %v33 = vld [vmem:[%s1 + $0x20] sm:$0xff]
    %v34 = vld [vmem:[%s1 + $0x28] sm:$0xff]
    %v35 = vld [vmem:[%s1 + $0x30] sm:$0xff]
    %v36 = vld [vmem:[%s1 + $0x38] sm:$0xff]
    %v37 = vld [vmem:[%s1 + $0x40] sm:$0xff]
    %v38 = vld [vmem:[%s1 + $0x48] sm:$0xff]
    %v39 = vld [vmem:[%s1 + $0x50] sm:$0xff]
    %v40 = vld [vmem:[%s1 + $0x58] sm:$0xff]
    %v41 = vld [vmem:[%s1 + $0x60] sm:$0xff]
    %v42 = vld [vmem:[%s1 + $0x68] sm:$0xff]
    %v43 = vld [vmem:[%s1 + $0x70] sm:$0xff]
    %v44 = vld [vmem:[%s1 + $0x78] sm:$0xff]
    %v45 = vld [vmem:[%s0] sm:$0xff]
    %v46 = vld [vmem:[%s2] sm:$0xff]
    %v47 = vld [vmem:[%s2 + $0x8] sm:$0xff]
    %v48 = vld [vmem:[%s2 + $0x10] sm:$0xff]
    %v49 = vld [vmem:[%s2 + $0x18] sm:$0xff]
    %v50 = vld [vmem:[%s2 + $0x20] sm:$0xff]
    %v51 = vld [vmem:[%s2 + $0x28] sm:$0xff]
    %v52 = vld [vmem:[%s2 + $0x30] sm:$0xff]
    %v53 = vld [vmem:[%s2 + $0x38] sm:$0xff]
    %v54 = vld [vmem:[%s2 + $0x40] sm:$0xff]
    %v55 = vld [vmem:[%s2 + $0x48] sm:$0xff]
    %v56 = vld [vmem:[%s2 + $0x50] sm:$0xff]
    %v57 = vld [vmem:[%s2 + $0x58] sm:$0xff]
    %v58 = vld [vmem:[%s2 + $0x60] sm:$0xff]
    %v59 = vld [vmem:[%s2 + $0x68] sm:$0xff]
    %v60 = vld [vmem:[%s2 + $0x70] sm:$0xff]
    %v61 = vld [vmem:[%s2 + $0x78] sm:$0xff]
    %63 = vset.pattern.permute.xlu0 0
    %64 = vperm.xlu0 %63, %v46
    %v65 = vpop.permute.xlu0 %64
    %68 = vset.pattern.permute.xlu0 0
    %69 = vperm.xlu0 %68, %v47
    %v70 = vpop.permute.xlu0 %69
    %73 = vset.pattern.permute.xlu0 0
    %74 = vperm.xlu0 %73, %v48
    %v75 = vpop.permute.xlu0 %74
    %78 = vset.pattern.permute.xlu0 0
    %79 = vperm.xlu0 %78, %v49
    %v80 = vpop.permute.xlu0 %79
    %83 = vset.pattern.permute.xlu0 0
    %84 = vperm.xlu0 %83, %v50
    %v85 = vpop.permute.xlu0 %84
    %88 = vset.pattern.permute.xlu0 0
    %89 = vperm.xlu0 %88, %v51
    %v90 = vpop.permute.xlu0 %89
    %93 = vset.pattern.permute.xlu0 0
    %94 = vperm.xlu0 %93, %v52
    %v95 = vpop.permute.xlu0 %94
    %98 = vset.pattern.permute.xlu0 0
    %99 = vperm.xlu0 %98, %v53
    %v100 = vpop.permute.xlu0 %99
    %103 = vset.pattern.permute.xlu0 0
    %104 = vperm.xlu0 %103, %v54
    %v105 = vpop.permute.xlu0 %104
    %108 = vset.pattern.permute.xlu0 0
    %109 = vperm.xlu0 %108, %v55
    %v110 = vpop.permute.xlu0 %109
    %113 = vset.pattern.permute.xlu0 0
    %114 = vperm.xlu0 %113, %v56
    %v115 = vpop.permute.xlu0 %114
    %118 = vset.pattern.permute.xlu0 0
    %119 = vperm.xlu0 %118, %v57
    %v120 = vpop.permute.xlu0 %119
    %123 = vset.pattern.permute.xlu0 0
    %124 = vperm.xlu0 %123, %v58
    %v125 = vpop.permute.xlu0 %124
    %128 = vset.pattern.permute.xlu0 0
    %129 = vperm.xlu0 %128, %v59
    %v130 = vpop.permute.xlu0 %129
    %133 = vset.pattern.permute.xlu0 0
    %134 = vperm.xlu0 %133, %v60
    %v135 = vpop.permute.xlu0 %134
    %138 = vset.pattern.permute.xlu0 0
    %139 = vperm.xlu0 %138, %v61
    %v140 = vpop.permute.xlu0 %139
    %vm142 = vcmask 31744
    %v144 = vsel %vm142, %v29, 0
    %v147 = vsel %vm142, %v30, 0
    %v150 = vsel %vm142, %v31, 0
    %v153 = vsel %vm142, %v32, 0
    %v156 = vsel %vm142, %v33, 0
    %v159 = vsel %vm142, %v34, 0
    %v162 = vsel %vm142, %v35, 0
    %v165 = vsel %vm142, %v36, 0
    %v168 = vsel %vm142, %v37, 0
    %v171 = vsel %vm142, %v38, 0
    %v174 = vsel %vm142, %v39, 0
    %v177 = vsel %vm142, %v40, 0
    %v180 = vsel %vm142, %v41, 0
    %v183 = vsel %vm142, %v42, 0
    %v186 = vsel %vm142, %v43, 0
    %v189 = vsel %vm142, %v44, 0
    %v192 = vsel %vm142, %v45, 0
    %194 = vmatprep.subr.mxu0 0.0
    %195 = vmatpush1.xpose.msra.mxu0 0.0
    %196 = vmatprep.subr.mxu0 0.0
    %197 = vmatpush1.xpose.msra.mxu0 0.0
    %198 = vmatprep.subr.mxu0 0.0
    %199 = vmatpush1.xpose.msra.mxu0 0.0
    %200 = vmatprep.subr.mxu0 0.0
    %201 = vmatpush1.xpose.msra.mxu0 0.0
    %202 = vmatprep.subr.mxu0 0.0
    %203 = vmatpush1.xpose.msra.mxu0 0.0
    %204 = vmatprep.subr.mxu0 0.0
    %205 = vmatpush1.xpose.msra.mxu0 0.0
    %206 = vmatprep.subr.mxu0 0.0
    %207 = vmatpush1.xpose.msra.mxu0 0.0
    %208 = vmatprep.subr.mxu0 0.0
    %209 = vmatpush1.xpose.msra.mxu0 0.0
    %210 = vmatprep.subr.mxu0 0.0
    %211 = vmatpush1.xpose.msra.mxu0 0.0
    %212 = vmatprep.subr.mxu0 0.0
    %213 = vmatpush1.xpose.msra.mxu0 0.0
    %214 = vmatprep.subr.mxu0 0.0
    %215 = vmatpush1.xpose.msra.mxu0 0.0
    %216 = vmatprep.subr.mxu0 0.0
    %217 = vmatpush1.xpose.msra.mxu0 0.0
    %218 = vmatprep.subr.mxu0 0.0
    %219 = vmatpush1.xpose.msra.mxu0 0.0
    %220 = vmatprep.subr.mxu0 0.0
    %221 = vmatpush1.xpose.msra.mxu0 0.0
    %222 = vmatprep.subr.mxu0 0.0
    %223 = vmatpush1.xpose.msra.mxu0 0.0
    %224 = vmatprep.subr.mxu0 0.0
    %225 = vmatpush1.xpose.msra.mxu0 %v192
    %226 = vmatprep.subr.mxu0 0.0
    %227 = vmatpush2.xpose.msra.mxu0 0.0
    %228 = vmatprep.subr.mxu0 0.0
    %229 = vmatpush2.xpose.msra.mxu0 0.0
    %230 = vmatprep.subr.mxu0 0.0
    %231 = vmatpush2.xpose.msra.mxu0 0.0
    %232 = vmatprep.subr.mxu0 0.0
    %233 = vmatpush2.xpose.msra.mxu0 0.0
    %234 = vmatprep.subr.mxu0 0.0
    %235 = vmatpush2.xpose.msra.mxu0 0.0
    %236 = vmatprep.subr.mxu0 0.0
    %237 = vmatpush2.xpose.msra.mxu0 0.0
    %238 = vmatprep.subr.mxu0 0.0
    %239 = vmatpush2.xpose.msra.mxu0 0.0
    %240 = vmatprep.subr.mxu0 0.0
    %241 = vmatpush2.xpose.msra.mxu0 0.0
    %242 = vmatprep.subr.mxu0 0.0
    %243 = vmatpush2.xpose.msra.mxu0 0.0
    %244 = vmatprep.subr.mxu0 0.0
    %245 = vmatpush2.xpose.msra.mxu0 0.0
    %246 = vmatprep.subr.mxu0 0.0
    %247 = vmatpush2.xpose.msra.mxu0 0.0
    %248 = vmatprep.subr.mxu0 0.0
    %249 = vmatpush2.xpose.msra.mxu0 0.0
    %250 = vmatprep.subr.mxu0 0.0
    %251 = vmatpush2.xpose.msra.mxu0 0.0
    %252 = vmatprep.subr.mxu0 0.0
    %253 = vmatpush2.xpose.msra.mxu0 0.0
    %254 = vmatprep.subr.mxu0 0.0
    %255 = vmatpush2.xpose.msra.mxu0 0.0
    %256 = vmatprep.subr.mxu0 0.0
    %257 = vmatpush2.xpose.msra.mxu0 0.0
    %258 = vmatprep.mubr.f32.mxu0 0.0
    %259 = vmatmul.mubr.f32.gmra.mxu0 %v144
    %v260 = vpop.f32.mrf.mxu0
    %v261 = vadd.f32 %v65, %v260
    %v262 = vpop.f32.mrf.mxu0
    %263 = vmatprep.mubr.f32.mxu0 0.0
    %264 = vmatmul.mubr.f32.gmra.mxu0 %v147
    %v265 = vpop.f32.mrf.mxu0
    %v266 = vadd.f32 %v70, %v265
    %v267 = vpop.f32.mrf.mxu0
    %268 = vmatprep.mubr.f32.mxu0 0.0
    %269 = vmatmul.mubr.f32.gmra.mxu0 %v150
    %v270 = vpop.f32.mrf.mxu0
    %v271 = vadd.f32 %v75, %v270
    %v272 = vpop.f32.mrf.mxu0
    %273 = vmatprep.mubr.f32.mxu0 0.0
    %274 = vmatmul.mubr.f32.gmra.mxu0 %v153
    %v275 = vpop.f32.mrf.mxu0
    %v276 = vadd.f32 %v80, %v275
    %v277 = vpop.f32.mrf.mxu0
    %278 = vmatprep.mubr.f32.mxu0 0.0
    %279 = vmatmul.mubr.f32.gmra.mxu0 %v156
    %v280 = vpop.f32.mrf.mxu0
    %v281 = vadd.f32 %v85, %v280
    %v282 = vpop.f32.mrf.mxu0
    %283 = vmatprep.mubr.f32.mxu0 0.0
    %284 = vmatmul.mubr.f32.gmra.mxu0 %v159
    %v285 = vpop.f32.mrf.mxu0
    %v286 = vadd.f32 %v90, %v285
    %v287 = vpop.f32.mrf.mxu0
    %288 = vmatprep.mubr.f32.mxu0 0.0
    %289 = vmatmul.mubr.f32.gmra.mxu0 %v162
    %v290 = vpop.f32.mrf.mxu0
    %v291 = vadd.f32 %v95, %v290
    %v292 = vpop.f32.mrf.mxu0
    %293 = vmatprep.mubr.f32.mxu0 0.0
    %294 = vmatmul.mubr.f32.gmra.mxu0 %v165
    %v295 = vpop.f32.mrf.mxu0
    %v296 = vadd.f32 %v100, %v295
    %v297 = vpop.f32.mrf.mxu0
    %298 = vmatprep.mubr.f32.mxu0 0.0
    %299 = vmatmul.mubr.f32.gmra.mxu0 %v168
    %v300 = vpop.f32.mrf.mxu0
    %v301 = vadd.f32 %v105, %v300
    %v302 = vpop.f32.mrf.mxu0
    %303 = vmatprep.mubr.f32.mxu0 0.0
    %304 = vmatmul.mubr.f32.gmra.mxu0 %v171
    %v305 = vpop.f32.mrf.mxu0
    %v306 = vadd.f32 %v110, %v305
    %v307 = vpop.f32.mrf.mxu0
    %308 = vmatprep.mubr.f32.mxu0 0.0
    %309 = vmatmul.mubr.f32.gmra.mxu0 %v174
    %v310 = vpop.f32.mrf.mxu0
    %v311 = vadd.f32 %v115, %v310
    %v312 = vpop.f32.mrf.mxu0
    %313 = vmatprep.mubr.f32.mxu0 0.0
    %314 = vmatmul.mubr.f32.gmra.mxu0 %v177
    %v315 = vpop.f32.mrf.mxu0
    %v316 = vadd.f32 %v120, %v315
    %v317 = vpop.f32.mrf.mxu0
    %318 = vmatprep.mubr.f32.mxu0 0.0
    %319 = vmatmul.mubr.f32.gmra.mxu0 %v180
    %v320 = vpop.f32.mrf.mxu0
    %v321 = vadd.f32 %v125, %v320
    %v322 = vpop.f32.mrf.mxu0
    %323 = vmatprep.mubr.f32.mxu0 0.0
    %324 = vmatmul.mubr.f32.gmra.mxu0 %v183
    %v325 = vpop.f32.mrf.mxu0
    %v326 = vadd.f32 %v130, %v325
    %v327 = vpop.f32.mrf.mxu0
    %328 = vmatprep.mubr.f32.mxu0 0.0
    %329 = vmatmul.mubr.f32.gmra.mxu0 %v186
    %v330 = vpop.f32.mrf.mxu0
    %v331 = vadd.f32 %v135, %v330
    %v332 = vpop.f32.mrf.mxu0
    %333 = vmatprep.mubr.f32.mxu0 0.0
    %334 = vmatmul.mubr.f32.gmra.mxu0 %v189
    %v335 = vpop.f32.mrf.mxu0
    %v336 = vadd.f32 %v140, %v335
    %v337 = vpop.f32.mrf.mxu0
    %338 = vdwg.mxu0
    %v339 = vmax.f32 %v261, 0.0
    %v340 = vmax.f32 %v266, 0.0
    %v341 = vmax.f32 %v271, 0.0
    %v342 = vmax.f32 %v276, 0.0
    %v343 = vmax.f32 %v281, 0.0
    %v344 = vmax.f32 %v286, 0.0
    %v345 = vmax.f32 %v291, 0.0
    %v346 = vmax.f32 %v296, 0.0
    %v347 = vmax.f32 %v301, 0.0
    %v348 = vmax.f32 %v306, 0.0
    %v349 = vmax.f32 %v311, 0.0
    %v350 = vmax.f32 %v316, 0.0
    %v351 = vmax.f32 %v321, 0.0
    %v352 = vmax.f32 %v326, 0.0
    %v353 = vmax.f32 %v331, 0.0
    %v354 = vmax.f32 %v336, 0.0
    %v355 = vld [vmem:[%s3] sm:$0xf]
    %v356 = vld [vmem:[%s3 + $0x4] sm:$0xf]
    %v357 = vld [vmem:[%s3 + $0x8] sm:$0xf]
    %v358 = vld [vmem:[%s3 + $0xc] sm:$0xf]
    %v359 = vld [vmem:[%s3 + $0x10] sm:$0xf]
    %v360 = vld [vmem:[%s3 + $0x14] sm:$0xf]
    %v361 = vld [vmem:[%s3 + $0x18] sm:$0xf]
    %v362 = vld [vmem:[%s3 + $0x1c] sm:$0xf]
    %v363 = vld [vmem:[%s3 + $0x20] sm:$0xf]
    %v364 = vld [vmem:[%s3 + $0x24] sm:$0xf]
    %v365 = vld [vmem:[%s3 + $0x28] sm:$0xf]
    %v366 = vld [vmem:[%s3 + $0x2c] sm:$0xf]
    %v367 = vld [vmem:[%s3 + $0x30] sm:$0xf]
    %v368 = vld [vmem:[%s3 + $0x34] sm:$0xf]
    %v369 = vld [vmem:[%s3 + $0x38] sm:$0xf]
    %v370 = vld [vmem:[%s3 + $0x3c] sm:$0xf]
    %v371 = vpack.c.bf16 %v340, %v339
    %v372 = vpack.c.bf16 %v342, %v341
    %v373 = vpack.c.bf16 %v344, %v343
    %v374 = vpack.c.bf16 %v346, %v345
    %v375 = vpack.c.bf16 %v348, %v347
    %v376 = vpack.c.bf16 %v350, %v349
    %v377 = vpack.c.bf16 %v352, %v351
    %v378 = vpack.c.bf16 %v354, %v353
    %v379 = vld [vmem:[%s4] sm:$0xff]
    %v380 = vld [vmem:[%s4 + $0x8] sm:$0xff]
    %v381 = vld [vmem:[%s4 + $0x10] sm:$0xff]
    %v382 = vld [vmem:[%s4 + $0x18] sm:$0xff]
    %v383 = vld [vmem:[%s4 + $0x20] sm:$0xff]
    %v384 = vld [vmem:[%s4 + $0x28] sm:$0xff]
    %v385 = vld [vmem:[%s4 + $0x30] sm:$0xff]
    %v386 = vld [vmem:[%s4 + $0x38] sm:$0xff]
    %v387 = vld [vmem:[%s4 + $0x40] sm:$0xff]
    %v388 = vld [vmem:[%s4 + $0x48] sm:$0xff]
    %v389 = vld [vmem:[%s4 + $0x50] sm:$0xff]
    %v390 = vld [vmem:[%s4 + $0x58] sm:$0xff]
    %v391 = vld [vmem:[%s4 + $0x60] sm:$0xff]
    %v392 = vld [vmem:[%s4 + $0x68] sm:$0xff]
    %v393 = vld [vmem:[%s4 + $0x70] sm:$0xff]
    %v394 = vld [vmem:[%s4 + $0x78] sm:$0xff]
    %396 = vset.pattern.permute.xlu0 0
    %397 = vperm.xlu0 %396, %v379
    %v398 = vpop.permute.xlu0 %397
    %401 = vset.pattern.permute.xlu0 0
    %402 = vperm.xlu0 %401, %v380
    %v403 = vpop.permute.xlu0 %402
    %406 = vset.pattern.permute.xlu0 0
    %407 = vperm.xlu0 %406, %v381
    %v408 = vpop.permute.xlu0 %407
    %411 = vset.pattern.permute.xlu0 0
    %412 = vperm.xlu0 %411, %v382
    %v413 = vpop.permute.xlu0 %412
    %416 = vset.pattern.permute.xlu0 0
    %417 = vperm.xlu0 %416, %v383
    %v418 = vpop.permute.xlu0 %417
    %421 = vset.pattern.permute.xlu0 0
    %422 = vperm.xlu0 %421, %v384
    %v423 = vpop.permute.xlu0 %422
    %426 = vset.pattern.permute.xlu0 0
    %427 = vperm.xlu0 %426, %v385
    %v428 = vpop.permute.xlu0 %427
    %431 = vset.pattern.permute.xlu0 0
    %432 = vperm.xlu0 %431, %v386
    %v433 = vpop.permute.xlu0 %432
    %436 = vset.pattern.permute.xlu0 0
    %437 = vperm.xlu0 %436, %v387
    %v438 = vpop.permute.xlu0 %437
    %441 = vset.pattern.permute.xlu0 0
    %442 = vperm.xlu0 %441, %v388
    %v443 = vpop.permute.xlu0 %442
    %446 = vset.pattern.permute.xlu0 0
    %447 = vperm.xlu0 %446, %v389
    %v448 = vpop.permute.xlu0 %447
    %451 = vset.pattern.permute.xlu0 0
    %452 = vperm.xlu0 %451, %v390
    %v453 = vpop.permute.xlu0 %452
    %456 = vset.pattern.permute.xlu0 0
    %457 = vperm.xlu0 %456, %v391
    %v458 = vpop.permute.xlu0 %457
    %461 = vset.pattern.permute.xlu0 0
    %462 = vperm.xlu0 %461, %v392
    %v463 = vpop.permute.xlu0 %462
    %466 = vset.pattern.permute.xlu0 0
    %467 = vperm.xlu0 %466, %v393
    %v468 = vpop.permute.xlu0 %467
    %471 = vset.pattern.permute.xlu0 0
    %472 = vperm.xlu0 %471, %v394
    %v473 = vpop.permute.xlu0 %472
    %v491 = vunpack.c.l.b16 %v355
    %v492 = vunpack.c.l.b16 %v356
    %v493 = vunpack.c.l.b16 %v357
    %v494 = vunpack.c.l.b16 %v358
    %v495 = vunpack.c.l.b16 %v359
    %v496 = vunpack.c.l.b16 %v360
    %v497 = vunpack.c.l.b16 %v361
    %v498 = vunpack.c.l.b16 %v362
    %v499 = vunpack.c.l.b16 %v363
    %v500 = vunpack.c.l.b16 %v364
    %v501 = vunpack.c.l.b16 %v365
    %v502 = vunpack.c.l.b16 %v366
    %v503 = vunpack.c.l.b16 %v367
    %v504 = vunpack.c.l.b16 %v368
    %v505 = vunpack.c.l.b16 %v369
    %v506 = vunpack.c.l.b16 %v370
    %v507 = vpack.c.b16 %v492, %v491
    %v508 = vpack.c.b16 %v494, %v493
    %v509 = vpack.c.b16 %v496, %v495
    %v510 = vpack.c.b16 %v498, %v497
    %v511 = vpack.c.b16 %v500, %v499
    %v512 = vpack.c.b16 %v502, %v501
    %v513 = vpack.c.b16 %v504, %v503
    %v514 = vpack.c.b16 %v506, %v505
    %523 = vmatprep.subr.bf16.mxu0 0
    %524 = vmatpush1.bf16.msra.mxu0 %v378
    %525 = vmatprep.subr.bf16.mxu0 0
    %526 = vmatpush1.bf16.msra.mxu0 %v377
    %527 = vmatprep.subr.bf16.mxu0 0
    %528 = vmatpush1.bf16.msra.mxu0 %v376
    %529 = vmatprep.subr.bf16.mxu0 0
    %530 = vmatpush1.bf16.msra.mxu0 %v375
    %531 = vmatprep.subr.bf16.mxu0 0
    %532 = vmatpush1.bf16.msra.mxu0 %v374
    %533 = vmatprep.subr.bf16.mxu0 0
    %534 = vmatpush1.bf16.msra.mxu0 %v373
    %535 = vmatprep.subr.bf16.mxu0 0
    %536 = vmatpush1.bf16.msra.mxu0 %v372
    %537 = vmatprep.subr.bf16.mxu0 0
    %538 = vmatpush1.bf16.msra.mxu0 %v371
    %539 = vmatprep.subr.bf16.mxu0 0
    %540 = vmatpush2.bf16.msra.mxu0 0
    %541 = vmatprep.subr.bf16.mxu0 0
    %542 = vmatpush2.bf16.msra.mxu0 0
    %543 = vmatprep.subr.bf16.mxu0 0
    %544 = vmatpush2.bf16.msra.mxu0 0
    %545 = vmatprep.subr.bf16.mxu0 0
    %546 = vmatpush2.bf16.msra.mxu0 0
    %547 = vmatprep.subr.bf16.mxu0 0
    %548 = vmatpush2.bf16.msra.mxu0 0
    %549 = vmatprep.subr.bf16.mxu0 0
    %550 = vmatpush2.bf16.msra.mxu0 0
    %551 = vmatprep.subr.bf16.mxu0 0
    %552 = vmatpush2.bf16.msra.mxu0 0
    %553 = vmatprep.subr.bf16.mxu0 0
    %554 = vmatpush2.bf16.msra.mxu0 0
    %555 = vmatprep.mubr.bf16.mxu0 0
    %556 = vmatmul.mubr.bf16.gmra.mxu0 %v507
    %v557 = vpop.f32.mrf.mxu0
    %v558 = vadd.f32 %v398, %v557
    %v559 = vpop.f32.mrf.mxu0
    %v560 = vpop.f32.mrf.mxu0
    %v561 = vadd.f32 %v403, %v560
    %v562 = vpop.f32.mrf.mxu0
    %563 = vmatprep.mubr.bf16.mxu0 0
    %564 = vmatmul.mubr.bf16.gmra.mxu0 %v508
    %v565 = vpop.f32.mrf.mxu0
    %v566 = vadd.f32 %v408, %v565
    %v567 = vpop.f32.mrf.mxu0
    %v568 = vpop.f32.mrf.mxu0
    %v569 = vadd.f32 %v413, %v568
    %v570 = vpop.f32.mrf.mxu0
    %571 = vmatprep.mubr.bf16.mxu0 0
    %572 = vmatmul.mubr.bf16.gmra.mxu0 %v509
    %v573 = vpop.f32.mrf.mxu0
    %v574 = vadd.f32 %v418, %v573
    %v575 = vpop.f32.mrf.mxu0
    %v576 = vpop.f32.mrf.mxu0
    %v577 = vadd.f32 %v423, %v576
    %v578 = vpop.f32.mrf.mxu0
    %579 = vmatprep.mubr.bf16.mxu0 0
    %580 = vmatmul.mubr.bf16.gmra.mxu0 %v510
    %v581 = vpop.f32.mrf.mxu0
    %v582 = vadd.f32 %v428, %v581
    %v583 = vpop.f32.mrf.mxu0
    %v584 = vpop.f32.mrf.mxu0
    %v585 = vadd.f32 %v433, %v584
    %v586 = vpop.f32.mrf.mxu0
    %587 = vmatprep.mubr.bf16.mxu0 0
    %588 = vmatmul.mubr.bf16.gmra.mxu0 %v511
    %v589 = vpop.f32.mrf.mxu0
    %v590 = vadd.f32 %v438, %v589
    %v591 = vpop.f32.mrf.mxu0
    %v592 = vpop.f32.mrf.mxu0
    %v593 = vadd.f32 %v443, %v592
    %v594 = vpop.f32.mrf.mxu0
    %595 = vmatprep.mubr.bf16.mxu0 0
    %596 = vmatmul.mubr.bf16.gmra.mxu0 %v512
    %v597 = vpop.f32.mrf.mxu0
    %v598 = vadd.f32 %v448, %v597
    %v599 = vpop.f32.mrf.mxu0
    %v600 = vpop.f32.mrf.mxu0
    %v601 = vadd.f32 %v453, %v600
    %v602 = vpop.f32.mrf.mxu0
    %603 = vmatprep.mubr.bf16.mxu0 0
    %604 = vmatmul.mubr.bf16.gmra.mxu0 %v513
    %v605 = vpop.f32.mrf.mxu0
    %v606 = vadd.f32 %v458, %v605
    %v607 = vpop.f32.mrf.mxu0
    %v608 = vpop.f32.mrf.mxu0
    %v609 = vadd.f32 %v463, %v608
    %v610 = vpop.f32.mrf.mxu0
    %611 = vmatprep.mubr.bf16.mxu0 0
    %612 = vmatmul.mubr.bf16.gmra.mxu0 %v514
    %v613 = vpop.f32.mrf.mxu0
    %v614 = vadd.f32 %v468, %v613
    %v615 = vpop.f32.mrf.mxu0
    %v616 = vpop.f32.mrf.mxu0
    %v617 = vadd.f32 %v473, %v616
    %v618 = vpop.f32.mrf.mxu0
    %619 = vdwg.mxu0
    %v620 = vmax.f32 %v558, 0.0
    %v621 = vmax.f32 %v561, 0.0
    %v622 = vmax.f32 %v566, 0.0
    %v623 = vmax.f32 %v569, 0.0
    %v624 = vmax.f32 %v574, 0.0
    %v625 = vmax.f32 %v577, 0.0
    %v626 = vmax.f32 %v582, 0.0
    %v627 = vmax.f32 %v585, 0.0
    %v628 = vmax.f32 %v590, 0.0
    %v629 = vmax.f32 %v593, 0.0
    %v630 = vmax.f32 %v598, 0.0
    %v631 = vmax.f32 %v601, 0.0
    %v632 = vmax.f32 %v606, 0.0
    %v633 = vmax.f32 %v609, 0.0
    %v634 = vmax.f32 %v614, 0.0
    %v635 = vmax.f32 %v617, 0.0
    %v636 = vld [vmem:[%s5] sm:$0xff]
    %v637 = vld [vmem:[%s5 + $0x8] sm:$0xff]
    %v638 = vld [vmem:[%s5 + $0x10] sm:$0xff]
    %v639 = vld [vmem:[%s5 + $0x18] sm:$0xff]
    %v640 = vld [vmem:[%s5 + $0x20] sm:$0xff]
    %v641 = vld [vmem:[%s5 + $0x28] sm:$0xff]
    %v642 = vld [vmem:[%s5 + $0x30] sm:$0xff]
    %v643 = vld [vmem:[%s5 + $0x38] sm:$0xff]
    %v644 = vld [vmem:[%s5 + $0x40] sm:$0xff]
    %v645 = vld [vmem:[%s5 + $0x48] sm:$0xff]
    %v646 = vld [vmem:[%s5 + $0x50] sm:$0xff]
    %v647 = vld [vmem:[%s5 + $0x58] sm:$0xff]
    %v648 = vld [vmem:[%s5 + $0x60] sm:$0xff]
    %v649 = vld [vmem:[%s5 + $0x68] sm:$0xff]
    %v650 = vld [vmem:[%s5 + $0x70] sm:$0xff]
    %v651 = vld [vmem:[%s5 + $0x78] sm:$0xff]
    %653 = vset.pattern.permute.xlu0 0
    %654 = vperm.xlu0 %653, %v636
    %v655 = vpop.permute.xlu0 %654
    %658 = vset.pattern.permute.xlu0 0
    %659 = vperm.xlu0 %658, %v637
    %v660 = vpop.permute.xlu0 %659
    %663 = vset.pattern.permute.xlu0 0
    %664 = vperm.xlu0 %663, %v638
    %v665 = vpop.permute.xlu0 %664
    %668 = vset.pattern.permute.xlu0 0
    %669 = vperm.xlu0 %668, %v639
    %v670 = vpop.permute.xlu0 %669
    %673 = vset.pattern.permute.xlu0 0
    %674 = vperm.xlu0 %673, %v640
    %v675 = vpop.permute.xlu0 %674
    %678 = vset.pattern.permute.xlu0 0
    %679 = vperm.xlu0 %678, %v641
    %v680 = vpop.permute.xlu0 %679
    %683 = vset.pattern.permute.xlu0 0
    %684 = vperm.xlu0 %683, %v642
    %v685 = vpop.permute.xlu0 %684
    %688 = vset.pattern.permute.xlu0 0
    %689 = vperm.xlu0 %688, %v643
    %v690 = vpop.permute.xlu0 %689
    %693 = vset.pattern.permute.xlu0 0
    %694 = vperm.xlu0 %693, %v644
    %v695 = vpop.permute.xlu0 %694
    %698 = vset.pattern.permute.xlu0 0
    %699 = vperm.xlu0 %698, %v645
    %v700 = vpop.permute.xlu0 %699
    %703 = vset.pattern.permute.xlu0 0
    %704 = vperm.xlu0 %703, %v646
    %v705 = vpop.permute.xlu0 %704
    %708 = vset.pattern.permute.xlu0 0
    %709 = vperm.xlu0 %708, %v647
    %v710 = vpop.permute.xlu0 %709
    %713 = vset.pattern.permute.xlu0 0
    %714 = vperm.xlu0 %713, %v648
    %v715 = vpop.permute.xlu0 %714
    %718 = vset.pattern.permute.xlu0 0
    %719 = vperm.xlu0 %718, %v649
    %v720 = vpop.permute.xlu0 %719
    %723 = vset.pattern.permute.xlu0 0
    %724 = vperm.xlu0 %723, %v650
    %v725 = vpop.permute.xlu0 %724
    %728 = vset.pattern.permute.xlu0 0
    %729 = vperm.xlu0 %728, %v651
    %v730 = vpop.permute.xlu0 %729
    %v732 = vmul.f32 %v620, %v655
    %v733 = vmul.f32 %v621, %v660
    %v734 = vmul.f32 %v622, %v665
    %v735 = vmul.f32 %v623, %v670
    %v736 = vmul.f32 %v624, %v675
    %v737 = vmul.f32 %v625, %v680
    %v738 = vmul.f32 %v626, %v685
    %v739 = vmul.f32 %v627, %v690
    %v740 = vmul.f32 %v628, %v695
    %v741 = vmul.f32 %v629, %v700
    %v742 = vmul.f32 %v630, %v705
    %v743 = vmul.f32 %v631, %v710
    %v744 = vmul.f32 %v632, %v715
    %v745 = vmul.f32 %v633, %v720
    %v746 = vmul.f32 %v634, %v725
    %v747 = vmul.f32 %v635, %v730
    %vm748 = vcmask 64512
    %v749 = vsel %vm748, %v732, 0.0
    %v750 = vsel %vm748, %v733, 0.0
    %v751 = vadd.f32 %v749, %v750
    %v752 = vsel %vm748, %v734, 0.0
    %v753 = vadd.f32 %v751, %v752
    %v754 = vsel %vm748, %v735, 0.0
    %v755 = vadd.f32 %v753, %v754
    %v756 = vsel %vm748, %v736, 0.0
    %v757 = vadd.f32 %v755, %v756
    %v758 = vsel %vm748, %v737, 0.0
    %v759 = vadd.f32 %v757, %v758
    %v760 = vsel %vm748, %v738, 0.0
    %v761 = vadd.f32 %v759, %v760
    %v762 = vsel %vm748, %v739, 0.0
    %v763 = vadd.f32 %v761, %v762
    %v764 = vsel %vm748, %v740, 0.0
    %v765 = vadd.f32 %v763, %v764
    %v766 = vsel %vm748, %v741, 0.0
    %v767 = vadd.f32 %v765, %v766
    %v768 = vsel %vm748, %v742, 0.0
    %v769 = vadd.f32 %v767, %v768
    %v770 = vsel %vm748, %v743, 0.0
    %v771 = vadd.f32 %v769, %v770
    %v772 = vsel %vm748, %v744, 0.0
    %v773 = vadd.f32 %v771, %v772
    %v774 = vsel %vm748, %v745, 0.0
    %v775 = vadd.f32 %v773, %v774
    %v776 = vsel %vm748, %v746, 0.0
    %v777 = vadd.f32 %v775, %v776
    %v778 = vsel %vm748, %v747, 0.0
    %v779 = vadd.f32 %v777, %v778
    %v780 = vrot.slane %v779, 4
    %v781 = vadd.f32 %v779, %v780
    %v782 = vrot.slane %v781, 2
    %v783 = vadd.f32 %v781, %v782
    %v784 = vrot.slane %v783, 1
    %v785 = vadd.f32 %v783, %v784
    %s786 = sld [smem:[#allocation2]]
    %v787 = vstv %s786
    %v788 = vadd.f32 %v785, %v787
    %vm789 = vcmask 57344
    %790 = vst.msk [vmem:[#allocation3] sm:$0x1] %vm789, %v788
    // Predicated region
    $region30: #{tpu_custom_call.1} parent=1 // pred_check
      _
    $region31: #{tpu_custom_call.1} parent=1 // pred_check_branch
      %792 = sbr.rel (0) target = $region33
    $region32: #{tpu_custom_call.1} parent=1 // pred_region
      %s794 = ssub.s32 16, 16
      %795 = vsyncadd [#allocation4], %s794
      %s797 = sshll.u32 [#allocation3], 4
      %s798 = int_to_ptr.vmem [resolvable:$true] %s797
      %800 = dma.vmem_to_hbm [thread:$0]  %s798, 16, %s7, [#allocation4]
    $region33: #{tpu_custom_call.1} parent=1 // pred_fallthru
      _
    // Predicated region
    $region34: #{tpu_custom_call.1} parent=1 // pred_check
      _
    $region35: #{tpu_custom_call.1} parent=1 // pred_check_branch
      %802 = sbr.rel (0) target = $region37
    $region36: #{tpu_custom_call.1} parent=1 // pred_region
      %803 = dma.done [#allocation4], 16
    $region37: #{tpu_custom_call.1} parent=1 // pred_fallthru
      _
    %804 = vsyncpa [#allocation4], 1

</llo_original>
